<compile_context>
chip_gen: v7x
topology: tpu7x:2x2x1
jax: 0.10.0
libtpu: 0.0.40
codegen_flags: <defaults>
</compile_context>

<pallas_src>
import jax
import jax.numpy as jnp
from jax import lax
from jax.experimental import pallas as pl
from jax.experimental.pallas import tpu as pltpu


def _round_up(n, m):
    return ((n + m - 1) // m) * m


# ----------------------------- Pallas kernel ------------------------------- #
def _disc_mlp_kernel(x_ref, lbl_ref,
                     w1_ref,
                     w2_ref, b2_ref,
                     w3_ref, b3_ref,
                     w4_ref, b4_ref,
                     out_ref):
    """Fused conditional-MLP discriminator.

       h1 = LReLU([x | onehot(labels)] @ [W1x ; (E @ W1e + b1)])   (K=256 dot)
       h2 = LReLU(h1 @ W2 + b2); h3 = LReLU(h2 @ W3 + b3); out = h3 @ W4 + b4

       bf16 operands / f32 MXU accumulation; leaky + downcast in bf16;
       all K/N dims padded to 128 lanes."""

    def leaky_bf16(h_f32):
        hb = h_f32.astype(jnp.bfloat16)
        return jnp.where(hb > 0, hb, hb * 0.2)

    bs = x_ref.shape[0]
    ncp = w1_ref.shape[0] - x_ref.shape[1]     # padded one-hot / class width (128)

    labels = lbl_ref[...]                      # (bs, 1) int32

    # one-hot(labels) over the padded class dim; padded classes never match.
    onehot = (labels == lax.broadcasted_iota(jnp.int32, (bs, ncp), 1)
              ).astype(jnp.bfloat16)           # (bs, 128)

    # Single K=256 contraction; b1 is folded into the class-table rows.
    xin = jnp.concatenate([x_ref[...], onehot], axis=-1)            # (bs, 256) bf16
    h1 = leaky_bf16(jnp.dot(xin, w1_ref[...],
                            preferred_element_type=jnp.float32))    # (bs, 512)

    h2 = leaky_bf16(jnp.dot(h1, w2_ref[...],
                            preferred_element_type=jnp.float32) + b2_ref[...])   # (bs, 256)

    h3 = leaky_bf16(jnp.dot(h2, w3_ref[...],
                            preferred_element_type=jnp.float32) + b3_ref[...])   # (bs, 128)

    h4 = jnp.dot(h3, w4_ref[...],
                 preferred_element_type=jnp.float32) + b4_ref[...]               # (bs, 128)

    out_ref[...] = h4.astype(out_ref.dtype)    # bf16 lane-dense store; logit in lane 0


# ---------------------- parameter packing (done once) ---------------------- #
def pack_params(params, input_dim=24):
    """Fold embedding + b1 into layer 1, pad to lane multiples, cast to bf16."""
    K1 = 128   # padded x-feature dim (input_dim -> 128)
    NC = 128   # padded one-hot / class dim
    H3 = 128   # padded third hidden dim (64 -> 128)
    NO = 128   # padded output lane width (1 -> 128)

    def pad2(a, rows, cols):
        return jnp.pad(a, ((0, rows - a.shape[0]), (0, cols - a.shape[1])))

    w1 = params["w1"]                         # (input_dim + emb, 512)
    w1_x = w1[:input_dim]                     # (input_dim, 512)
    w1_e = w1[input_dim:]                     # (emb, 512)
    # Exactly one class row is selected per batch row, so b1 can ride on it.
    class_table = params["embed"] @ w1_e + params["b1"]   # (num_classes, 512)

    w1_fused = jnp.concatenate(
        [pad2(w1_x, K1, 512), pad2(class_table, NC, 512)], axis=0)   # (256, 512)

    return {
        "w1": w1_fused.astype(jnp.bfloat16),                          # (256, 512)
        "w2": params["w2"].astype(jnp.bfloat16),                      # (512, 256)
        "b2": params["b2"].astype(jnp.float32),                       # (1, 256)
        "w3": pad2(params["w3"], 256, H3).astype(jnp.bfloat16),       # (256, 128)
        "b3": pad2(params["b3"], 1, H3).astype(jnp.float32),          # (1, 128)
        "w4": pad2(params["w4"], H3, NO).astype(jnp.bfloat16),        # (128, 128)
        "b4": pad2(params["b4"], 1, NO).astype(jnp.float32),          # (1, 128)
    }


# ------------------------------- wrapper ------------------------------------ #
def discriminator_forward(x, labels, packed):
    """
    x      : (B, input_dim) float32
    labels : (B,) int   in [0, num_classes)
    packed : output of pack_params()
    """
    B, in_dim = x.shape
    K1 = 128
    NO = packed["b4"].shape[1]           # 128

    # Batch tiling:
    #   * small B  -> one tile, rounded to 16 rows (bf16 sublane pair).
    #   * B >= 512 -> cap tiles at 512 rows (per-step overhead amortized) and
    #     keep the grid >= 2 steps so both v7x TensorCores are fed.
    if B < 512:
        block_b = _round_up(B, 16)
    else:
        block_b = min(512, _round_up((B + 1) // 2, 128))
    B_pad = _round_up(B, block_b)
    grid = (B_pad // block_b,)

    # Tiny, fuseable glue: pad x to lane-dense bf16 and labels to (B_pad, 1).
    # NOTE: padded rows end up with label 0 -> they produce class-0 garbage
    # logits; harmless because rows >= B are sliced off below (never sum over
    # the padded slab).
    x_pad = jnp.pad(x.astype(jnp.bfloat16), ((0, B_pad - B), (0, K1 - in_dim)))
    lbl = jnp.pad(labels.astype(jnp.int32).reshape(B, 1), ((0, B_pad - B), (0, 0)))

    weight_args = (packed["w1"],
                   packed["w2"], packed["b2"],
                   packed["w3"], packed["b3"],
                   packed["w4"], packed["b4"])

    batch_spec = lambda cols: pl.BlockSpec((block_b, cols), lambda i: (i, 0))
    whole = lambda a: pl.BlockSpec(a.shape, lambda i: (0, 0))   # resident weights

    in_specs = ([batch_spec(K1), batch_spec(1)]
                + [whole(a) for a in weight_args])

    # Padded FLOPs / real byte traffic (bf16 weights/acts, bf16 output slab).
    flops = 2 * B_pad * (256 * 512 + 512 * 256 + 256 * 128 + 128 * 128)
    bytes_accessed = int(sum(a.size * a.dtype.itemsize for a in weight_args)
                         + x_pad.size * 2 + lbl.size * 4 + B_pad * NO * 2)

    out_full = pl.pallas_call(
        _disc_mlp_kernel,
        out_shape=jax.ShapeDtypeStruct((B_pad, NO), jnp.bfloat16),
        grid=grid,
        in_specs=in_specs,
        out_specs=pl.BlockSpec((block_b, NO), lambda i: (i, 0)),
        compiler_params=pltpu.CompilerParams(
            dimension_semantics=("parallel",)),
        cost_estimate=pl.CostEstimate(
            flops=flops, transcendentals=0, bytes_accessed=bytes_accessed),
    )(x_pad, lbl, *weight_args)

    return out_full[:B, 0:1].astype(jnp.float32)   # logit lives in lane 0


# ----------------------- deterministic parameter init ---------------------- #
def init_params(key, input_dim=24, num_classes=4, embedding_size=12):
    dims = [input_dim + embedding_size, 512, 256, 64, 1]
    keys = jax.random.split(key, 2 * (len(dims) - 1) + 1)
    params = {}
    ki = 0
    for li in range(len(dims) - 1):
        fan_in, fan_out = dims[li], dims[li + 1]
        bound = 1.0 / (fan_in ** 0.5)
        # weights stored as (in, out) so the kernel does x @ W directly
        params[f"w{li + 1}"] = jax.random.uniform(
            keys[ki], (fan_in, fan_out), jnp.float32, -bound, bound)
        ki += 1
        params[f"b{li + 1}"] = jax.random.uniform(
            keys[ki], (1, fan_out), jnp.float32, -bound, bound)
        ki += 1
    # nn.Embedding default init: N(0, 1)
    params["embed"] = jax.random.normal(
        keys[ki], (num_classes, embedding_size), jnp.float32)
    return params


# ----------------------------- pure-JAX reference --------------------------- #
def reference_forward(x, labels, params):
    emb = params["embed"][labels]
    h = jnp.concatenate([x, emb], axis=1)
    lrelu = lambda v: jnp.where(v > 0, v, 0.2 * v)
    h = lrelu(h @ params["w1"] + params["b1"])
    h = lrelu(h @ params["w2"] + params["b2"])
    h = lrelu(h @ params["w3"] + params["b3"])
    return h @ params["w4"] + params["b4"]


if __name__ == "__main__":
    key = jax.random.PRNGKey(0)
    k_param, k_x, k_lbl = jax.random.split(key, 3)

    input_dim, num_classes, embedding_size = 24, 4, 12
    batch = 8

    params = init_params(k_param, input_dim, num_classes, embedding_size)
    x = jax.random.normal(k_x, (batch, input_dim), jnp.float32)
    labels = jax.random.randint(k_lbl, (batch,), 0, num_classes, jnp.int32)

    packed = pack_params(params, input_dim=input_dim)

    fwd = jax.jit(discriminator_forward)
    out = fwd(x, labels, packed)
    out = jax.block_until_ready(out)

    ref = reference_forward(x, labels, params)
    assert out.shape == (batch, 1), out.shape
    # bf16 weights/activations/output -> loosened tolerance vs f32 reference
    assert jnp.allclose(out, ref, atol=2e-2, rtol=2e-2), (out, ref)

    print("KERNEL_OK")
</pallas_src>

<mosaic_0001>
module attributes {stable_mosaic.version = 11 : i64} {
  func.func @_disc_mlp_kernel(%arg0: i32, %arg1: memref<16x128xbf16, #tpu.memory_space<vmem>>, %arg2: memref<16x1xi32, #tpu.memory_space<vmem>>, %arg3: memref<256x512xbf16, #tpu.memory_space<vmem>>, %arg4: memref<512x256xbf16, #tpu.memory_space<vmem>>, %arg5: memref<1x256xf32, #tpu.memory_space<vmem>>, %arg6: memref<256x128xbf16, #tpu.memory_space<vmem>>, %arg7: memref<1x128xf32, #tpu.memory_space<vmem>>, %arg8: memref<128x128xbf16, #tpu.memory_space<vmem>>, %arg9: memref<1x128xf32, #tpu.memory_space<vmem>>, %arg10: memref<16x128xbf16, #tpu.memory_space<vmem>>) attributes {dimension_semantics = [#tpu.dimension_semantics<parallel>], iteration_bounds = array<i64: 1>, scalar_prefetch = 0 : i64, scratch_operands = 0 : i64, tpu.core_type = #tpu.core_type<tc>, window_params = [{transform_indices = @transform_0, window_bounds = array<i64: 16, 128>}, {transform_indices = @transform_1, window_bounds = array<i64: 16, 1>}, {pipeline_mode = #tpu.pipeline_mode<synchronous>, transform_indices = @transform_2, window_bounds = array<i64: 256, 512>}, {pipeline_mode = #tpu.pipeline_mode<synchronous>, transform_indices = @transform_3, window_bounds = array<i64: 512, 256>}, {pipeline_mode = #tpu.pipeline_mode<synchronous>, transform_indices = @transform_4, window_bounds = array<i64: 1, 256>}, {pipeline_mode = #tpu.pipeline_mode<synchronous>, transform_indices = @transform_5, window_bounds = array<i64: 256, 128>}, {pipeline_mode = #tpu.pipeline_mode<synchronous>, transform_indices = @transform_6, window_bounds = array<i64: 1, 128>}, {pipeline_mode = #tpu.pipeline_mode<synchronous>, transform_indices = @transform_7, window_bounds = array<i64: 128, 128>}, {pipeline_mode = #tpu.pipeline_mode<synchronous>, transform_indices = @transform_8, window_bounds = array<i64: 1, 128>}, {transform_indices = @transform_9, window_bounds = array<i64: 16, 128>}]} {
    %c0 = arith.constant 0 : index
    %c0_0 = arith.constant 0 : index
    %0 = vector.load %arg2[%c0, %c0_0] : memref<16x1xi32, #tpu.memory_space<vmem>>, vector<16x1xi32>
    %1 = tpu.iota {dimensions = array<i32: 1>} : vector<16x128xi32>
    %2 = vector.broadcast %0 : vector<16x1xi32> to vector<16x128xi32>
    %3 = arith.cmpi eq, %2, %1 : vector<16x128xi32>
    %4 = arith.extui %3 : vector<16x128xi1> to vector<16x128xi32>
    %5 = arith.sitofp %4 : vector<16x128xi32> to vector<16x128xf32>
    %6 = arith.truncf %5 : vector<16x128xf32> to vector<16x128xbf16>
    %c0_1 = arith.constant 0 : index
    %c0_2 = arith.constant 0 : index
    %7 = vector.load %arg1[%c0_1, %c0_2] : memref<16x128xbf16, #tpu.memory_space<vmem>>, vector<16x128xbf16>
    %8 = tpu.concatenate %7, %6 in 1 : vector<16x128xbf16>, vector<16x128xbf16> -> vector<16x256xbf16>
    %c0_3 = arith.constant 0 : index
    %c0_4 = arith.constant 0 : index
    %9 = vector.load %arg3[%c0_3, %c0_4] : memref<256x512xbf16, #tpu.memory_space<vmem>>, vector<256x512xbf16>
    %cst = arith.constant dense<0.000000e+00> : vector<16x512xf32>
    %10 = tpu.matmul %8, %9, %cst {dimension_numbers = #tpu.dot_dimension_numbers<[1], [0], [0], [1], [0, 0, 1, 1], [], []>} : vector<16x256xbf16>, vector<256x512xbf16>, vector<16x512xf32> -> vector<16x512xf32>
    %11 = arith.truncf %10 : vector<16x512xf32> to vector<16x512xbf16>
    %cst_5 = arith.constant 0.000000e+00 : bf16
    %12 = vector.broadcast %cst_5 : bf16 to vector<16x512xbf16>
    %13 = arith.cmpf ogt, %11, %12 : vector<16x512xbf16>
    %cst_6 = arith.constant 2.001950e-01 : bf16
    %14 = vector.broadcast %cst_6 : bf16 to vector<16x512xbf16>
    %15 = arith.mulf %11, %14 : vector<16x512xbf16>
    %16 = arith.select %13, %11, %15 : vector<16x512xi1>, vector<16x512xbf16>
    %c0_7 = arith.constant 0 : index
    %c0_8 = arith.constant 0 : index
    %17 = vector.load %arg4[%c0_7, %c0_8] : memref<512x256xbf16, #tpu.memory_space<vmem>>, vector<512x256xbf16>
    %cst_9 = arith.constant dense<0.000000e+00> : vector<16x256xf32>
    %18 = tpu.matmul %16, %17, %cst_9 {dimension_numbers = #tpu.dot_dimension_numbers<[1], [0], [0], [1], [0, 0, 1, 1], [], []>} : vector<16x512xbf16>, vector<512x256xbf16>, vector<16x256xf32> -> vector<16x256xf32>
    %c0_10 = arith.constant 0 : index
    %c0_11 = arith.constant 0 : index
    %19 = vector.load %arg5[%c0_10, %c0_11] : memref<1x256xf32, #tpu.memory_space<vmem>>, vector<1x256xf32>
    %20 = vector.broadcast %19 : vector<1x256xf32> to vector<16x256xf32>
    %21 = arith.addf %18, %20 : vector<16x256xf32>
    %22 = arith.truncf %21 : vector<16x256xf32> to vector<16x256xbf16>
    %cst_12 = arith.constant 0.000000e+00 : bf16
    %23 = vector.broadcast %cst_12 : bf16 to vector<16x256xbf16>
    %24 = arith.cmpf ogt, %22, %23 : vector<16x256xbf16>
    %cst_13 = arith.constant 2.001950e-01 : bf16
    %25 = vector.broadcast %cst_13 : bf16 to vector<16x256xbf16>
    %26 = arith.mulf %22, %25 : vector<16x256xbf16>
    %27 = arith.select %24, %22, %26 : vector<16x256xi1>, vector<16x256xbf16>
    %c0_14 = arith.constant 0 : index
    %c0_15 = arith.constant 0 : index
    %28 = vector.load %arg6[%c0_14, %c0_15] : memref<256x128xbf16, #tpu.memory_space<vmem>>, vector<256x128xbf16>
    %cst_16 = arith.constant dense<0.000000e+00> : vector<16x128xf32>
    %29 = tpu.matmul %27, %28, %cst_16 {dimension_numbers = #tpu.dot_dimension_numbers<[1], [0], [0], [1], [0, 0, 1, 1], [], []>} : vector<16x256xbf16>, vector<256x128xbf16>, vector<16x128xf32> -> vector<16x128xf32>
    %c0_17 = arith.constant 0 : index
    %c0_18 = arith.constant 0 : index
    %30 = vector.load %arg7[%c0_17, %c0_18] : memref<1x128xf32, #tpu.memory_space<vmem>>, vector<1x128xf32>
    %31 = vector.broadcast %30 : vector<1x128xf32> to vector<16x128xf32>
    %32 = arith.addf %29, %31 : vector<16x128xf32>
    %33 = arith.truncf %32 : vector<16x128xf32> to vector<16x128xbf16>
    %cst_19 = arith.constant 0.000000e+00 : bf16
    %34 = vector.broadcast %cst_19 : bf16 to vector<16x128xbf16>
    %35 = arith.cmpf ogt, %33, %34 : vector<16x128xbf16>
    %cst_20 = arith.constant 2.001950e-01 : bf16
    %36 = vector.broadcast %cst_20 : bf16 to vector<16x128xbf16>
    %37 = arith.mulf %33, %36 : vector<16x128xbf16>
    %38 = arith.select %35, %33, %37 : vector<16x128xi1>, vector<16x128xbf16>
    %c0_21 = arith.constant 0 : index
    %c0_22 = arith.constant 0 : index
    %39 = vector.load %arg8[%c0_21, %c0_22] : memref<128x128xbf16, #tpu.memory_space<vmem>>, vector<128x128xbf16>
    %cst_23 = arith.constant dense<0.000000e+00> : vector<16x128xf32>
    %40 = tpu.matmul %38, %39, %cst_23 {dimension_numbers = #tpu.dot_dimension_numbers<[1], [0], [0], [1], [0, 0, 1, 1], [], []>} : vector<16x128xbf16>, vector<128x128xbf16>, vector<16x128xf32> -> vector<16x128xf32>
    %c0_24 = arith.constant 0 : index
    %c0_25 = arith.constant 0 : index
    %41 = vector.load %arg9[%c0_24, %c0_25] : memref<1x128xf32, #tpu.memory_space<vmem>>, vector<1x128xf32>
    %42 = vector.broadcast %41 : vector<1x128xf32> to vector<16x128xf32>
    %43 = arith.addf %40, %42 : vector<16x128xf32>
    %44 = arith.truncf %43 : vector<16x128xf32> to vector<16x128xbf16>
    %c0_26 = arith.constant 0 : index
    %c0_27 = arith.constant 0 : index
    %45 = vector.load %arg10[%c0_26, %c0_27] : memref<16x128xbf16, #tpu.memory_space<vmem>>, vector<16x128xbf16>
    tpu.vector_store %arg10[%c0_26, %c0_27], %44 {strides = array<i32>} : memref<16x128xbf16, #tpu.memory_space<vmem>>, vector<16x128xbf16>,
    return
  }
  func.func @transform_0(%arg0: i32) -> (i32, i32) {
    %c0_i32 = arith.constant 0 : i32
    %c0_i32_0 = arith.constant 0 : i32
    return %arg0, %c0_i32 : i32, i32
  }
  func.func @transform_1(%arg0: i32) -> (i32, i32) {
    %c0_i32 = arith.constant 0 : i32
    %c0_i32_0 = arith.constant 0 : i32
    return %arg0, %c0_i32 : i32, i32
  }
  func.func @transform_2(%arg0: i32) -> (i32, i32) {
    %c0_i32 = arith.constant 0 : i32
    %c0_i32_0 = arith.constant 0 : i32
    %c0_i32_1 = arith.constant 0 : i32
    return %c0_i32, %c0_i32_0 : i32, i32
  }
  func.func @transform_3(%arg0: i32) -> (i32, i32) {
    %c0_i32 = arith.constant 0 : i32
    %c0_i32_0 = arith.constant 0 : i32
    %c0_i32_1 = arith.constant 0 : i32
    return %c0_i32, %c0_i32_0 : i32, i32
  }
  func.func @transform_4(%arg0: i32) -> (i32, i32) {
    %c0_i32 = arith.constant 0 : i32
    %c0_i32_0 = arith.constant 0 : i32
    %c0_i32_1 = arith.constant 0 : i32
    return %c0_i32, %c0_i32_0 : i32, i32
  }
  func.func @transform_5(%arg0: i32) -> (i32, i32) {
    %c0_i32 = arith.constant 0 : i32
    %c0_i32_0 = arith.constant 0 : i32
    %c0_i32_1 = arith.constant 0 : i32
    return %c0_i32, %c0_i32_0 : i32, i32
  }
  func.func @transform_6(%arg0: i32) -> (i32, i32) {
    %c0_i32 = arith.constant 0 : i32
    %c0_i32_0 = arith.constant 0 : i32
    %c0_i32_1 = arith.constant 0 : i32
    return %c0_i32, %c0_i32_0 : i32, i32
  }
  func.func @transform_7(%arg0: i32) -> (i32, i32) {
    %c0_i32 = arith.constant 0 : i32
    %c0_i32_0 = arith.constant 0 : i32
    %c0_i32_1 = arith.constant 0 : i32
    return %c0_i32, %c0_i32_0 : i32, i32
  }
  func.func @transform_8(%arg0: i32) -> (i32, i32) {
    %c0_i32 = arith.constant 0 : i32
    %c0_i32_0 = arith.constant 0 : i32
    %c0_i32_1 = arith.constant 0 : i32
    return %c0_i32, %c0_i32_0 : i32, i32
  }
  func.func @transform_9(%arg0: i32) -> (i32, i32) {
    %c0_i32 = arith.constant 0 : i32
    %c0_i32_0 = arith.constant 0 : i32
    return %arg0, %c0_i32 : i32, i32
  }
}

</mosaic_0001>

<llo_original>
// kernel: discriminator_forward.1
$region0: #{discriminator_forward.1}
  #allocation0 [shape = 'u32[]', space=smem, size = 0x4, offset = 0x4, fixed_abs, tag = 'smem constant byte address 0x4 - core index']
  #allocation1 [shape = 'u32[144,128]{1,0:T(1,128)}', space=vmem, size = 0x12000, scoped, tag = 'internal scratch']
  %s0 = inlined_call_operand.vmem [shape: bf16[16,128], index: 0, kind: input, shape index: {}]
  %s1 = inlined_call_operand.vmem [shape: s32[16,1], index: 1, kind: input, shape index: {}]
  %s2 = inlined_call_operand.hbm [shape: bf16[256,512], index: 2, kind: input, shape index: {}]
  %s3 = inlined_call_operand.hbm [shape: bf16[512,256], index: 3, kind: input, shape index: {}]
  %s4 = inlined_call_operand.vmem [shape: f32[1,256], index: 4, kind: input, shape index: {}]
  %s5 = inlined_call_operand.hbm [shape: bf16[256,128], index: 5, kind: input, shape index: {}]
  %s6 = inlined_call_operand.vmem [shape: f32[1,128], index: 6, kind: input, shape index: {}]
  %s7 = inlined_call_operand.vmem [shape: bf16[128,128], index: 7, kind: input, shape index: {}]
  %s8 = inlined_call_operand.vmem [shape: f32[1,128], index: 8, kind: input, shape index: {}]
  %s9 = inlined_call_operand.vmem [shape: bf16[16,128], index: 9, kind: output, shape index: {}]
  %s10 = sld [smem:[#allocation0]]
  $region58: #{discriminator_forward.1} parent=0
    _
  %s12 = ssub.s32 1, %s10
  %s13 = scalar_select 0, %s12, %s10
  $region1: #{discriminator_forward.1} parent=0
    #allocation2 [shape = 'u8[262144]{0}', space=vmem, size = 0x40000, scoped, tag = 'input window, operand 2, single buffered']
    #allocation3 [shape = 's32[1]{0}', space=sflag, size = 0x4, scoped, tag = 'scoped memory for discriminator_forward.1']
    #allocation4 [shape = 'u8[262144]{0}', space=vmem, size = 0x40000, scoped, tag = 'input window, operand 3, single buffered']
    #allocation5 [shape = 's32[1]{0}', space=sflag, size = 0x4, scoped, tag = 'scoped memory for discriminator_forward.1']
    #allocation6 [shape = 'u8[65536]{0}', space=vmem, size = 0x10000, scoped, tag = 'input window, operand 5, single buffered']
    %14 = vsyncpa [#allocation3], 0
    %15 = vsyncpa [#allocation5], 0
    // Predicated region
    $region2: #{discriminator_forward.1} parent=1 // pred_check
      _
    $region3: #{discriminator_forward.1} parent=1 // pred_check_branch
      %17 = sbr.rel (0) target = $region5
    $region4: #{discriminator_forward.1} parent=1 // pred_region
      _
    $region5: #{discriminator_forward.1} parent=1 // pred_fallthru
      _
    // Predicated region
    $region6: #{discriminator_forward.1} parent=1 // pred_check
      _
    $region7: #{discriminator_forward.1} parent=1 // pred_check_branch
      %19 = sbr.rel (0) target = $region9
    $region8: #{discriminator_forward.1} parent=1 // pred_region
      _
    $region9: #{discriminator_forward.1} parent=1 // pred_fallthru
      _
    // Predicated region
    $region10: #{discriminator_forward.1} parent=1 // pred_check
      _
    $region11: #{discriminator_forward.1} parent=1 // pred_check_branch
      %21 = sbr.rel (0) target = $region13
    $region12: #{discriminator_forward.1} parent=1 // pred_region
      %s23 = ssub.s32 8192, 8192
      %24 = vsyncadd [#allocation3], %s23
      %s25 = sshll.u32 [#allocation2], 4
      %s26 = int_to_ptr.vmem [resolvable:$true] %s25
      %31 = dma.hbm_to_vmem [thread:$0]  %s2, 8192, %s26, [#allocation3], 256, 256, 16
    $region13: #{discriminator_forward.1} parent=1 // pred_fallthru
      _
    // Predicated region
    $region14: #{discriminator_forward.1} parent=1 // pred_check
      _
    $region15: #{discriminator_forward.1} parent=1 // pred_check_branch
      %33 = sbr.rel (0) target = $region17
    $region16: #{discriminator_forward.1} parent=1 // pred_region
      %s35 = ssub.s32 8192, 8192
      %36 = vsyncadd [#allocation5], %s35
      %s37 = sshll.u32 [#allocation4], 4
      %s38 = int_to_ptr.vmem [resolvable:$true] %s37
      %43 = dma.hbm_to_vmem [thread:$0]  %s3, 8192, %s38, [#allocation5], 128, 128, 8
    $region17: #{discriminator_forward.1} parent=1 // pred_fallthru
      _
    // Predicated region
    $region18: #{discriminator_forward.1} parent=1 // pred_check
      _
    $region19: #{discriminator_forward.1} parent=1 // pred_check_branch
      %45 = sbr.rel (0) target = $region21
    $region20: #{discriminator_forward.1} parent=1 // pred_region
      _
    $region21: #{discriminator_forward.1} parent=1 // pred_fallthru
      _
    // Predicated region
    $region22: #{discriminator_forward.1} parent=1 // pred_check
      _
    $region23: #{discriminator_forward.1} parent=1 // pred_check_branch
      %47 = sbr.rel (0) target = $region25
    $region24: #{discriminator_forward.1} parent=1 // pred_region
      %s49 = ssub.s32 2048, 2048
      %50 = vsyncadd [#allocation5], %s49
      %s51 = sshll.u32 [#allocation6], 4
      %s52 = int_to_ptr.vmem [resolvable:$true] %s51
      %57 = dma.hbm_to_vmem [thread:$0]  %s5, 2048, %s52, [#allocation5], 64, 64, 4
    $region25: #{discriminator_forward.1} parent=1 // pred_fallthru
      _
    // Predicated region
    $region26: #{discriminator_forward.1} parent=1 // pred_check
      _
    $region27: #{discriminator_forward.1} parent=1 // pred_check_branch
      %59 = sbr.rel (0) target = $region29
    $region28: #{discriminator_forward.1} parent=1 // pred_region
      _
    $region29: #{discriminator_forward.1} parent=1 // pred_fallthru
      _
    // Predicated region
    $region30: #{discriminator_forward.1} parent=1 // pred_check
      _
    $region31: #{discriminator_forward.1} parent=1 // pred_check_branch
      %61 = sbr.rel (0) target = $region33
    $region32: #{discriminator_forward.1} parent=1 // pred_region
      _
    $region33: #{discriminator_forward.1} parent=1 // pred_fallthru
      _
    // Predicated region
    $region34: #{discriminator_forward.1} parent=1 // pred_check
      _
    $region35: #{discriminator_forward.1} parent=1 // pred_check_branch
      %63 = sbr.rel (0) target = $region37
    $region36: #{discriminator_forward.1} parent=1 // pred_region
      _
    $region37: #{discriminator_forward.1} parent=1 // pred_fallthru
      _
    // Predicated region
    $region38: #{discriminator_forward.1} parent=1 // pred_check
      _
    $region39: #{discriminator_forward.1} parent=1 // pred_check_branch
      %65 = sbr.rel (0) target = $region41
    $region40: #{discriminator_forward.1} parent=1 // pred_region
      %66 = dma.done [#allocation3], 8192
    $region41: #{discriminator_forward.1} parent=1 // pred_fallthru
      _
    // Predicated region
    $region42: #{discriminator_forward.1} parent=1 // pred_check
      _
    $region43: #{discriminator_forward.1} parent=1 // pred_check_branch
      %68 = sbr.rel (0) target = $region45
    $region44: #{discriminator_forward.1} parent=1 // pred_region
      %69 = dma.done [#allocation5], 8192
    $region45: #{discriminator_forward.1} parent=1 // pred_fallthru
      _
    // Predicated region
    $region46: #{discriminator_forward.1} parent=1 // pred_check
      _
    $region47: #{discriminator_forward.1} parent=1 // pred_check_branch
      %71 = sbr.rel (0) target = $region49
    $region48: #{discriminator_forward.1} parent=1 // pred_region
      %72 = dma.done [#allocation5], 2048
    $region49: #{discriminator_forward.1} parent=1 // pred_fallthru
      _
    %v75 = vld [vmem:[%s1] sm:$0xff]
    %v76 = vld [vmem:[%s1 + $0x8] sm:$0xff]
    %v77 = vlaneseq
    %v78 = vand.u32 %v77, 127
    %79 = vset.pattern.permute.xlu0 0
    %80 = vperm.xlu0 %79, %v75
    %v81 = vpop.permute.xlu0 %80
    %82 = vset.pattern.permute.xlu0 0
    %83 = vperm.xlu0 %82, %v76
    %v84 = vpop.permute.xlu0 %83
    %vm85 = vcmp.eq.s32.totalorder %v81, %v78
    %vm86 = vcmp.eq.s32.totalorder %v84, %v78
    %v87 = vsel %vm85, 1, 0
    %v88 = vsel %vm86, 1, 0
    %v89 = vcvt.s32.f32 %v87
    %v90 = vcvt.s32.f32 %v88
    %v91 = vpack.c.bf16 %v90, %v89
    %v92 = vld [vmem:[%s0] sm:$0xf]
    %v93 = vld [vmem:[%s0 + $0x4] sm:$0xf]
    %v96 = vunpack.c.l.b16 %v92
    %v97 = vunpack.c.l.b16 %v93
    %v98 = vpack.c.b16 %v97, %v96
    %v100 = vld [vmem:[#allocation2] sm:$0xff]
    %v101 = vld [vmem:[#allocation2 + $0x8] sm:$0xff]
    %v102 = vld [vmem:[#allocation2 + $0x10] sm:$0xff]
    %v103 = vld [vmem:[#allocation2 + $0x18] sm:$0xff]
    %v104 = vld [vmem:[#allocation2 + $0x20] sm:$0xff]
    %v105 = vld [vmem:[#allocation2 + $0x28] sm:$0xff]
    %v106 = vld [vmem:[#allocation2 + $0x30] sm:$0xff]
    %v107 = vld [vmem:[#allocation2 + $0x38] sm:$0xff]
    %v108 = vld [vmem:[#allocation2 + $0x40] sm:$0xff]
    %v109 = vld [vmem:[#allocation2 + $0x48] sm:$0xff]
    %v110 = vld [vmem:[#allocation2 + $0x50] sm:$0xff]
    %v111 = vld [vmem:[#allocation2 + $0x58] sm:$0xff]
    %v112 = vld [vmem:[#allocation2 + $0x60] sm:$0xff]
    %v113 = vld [vmem:[#allocation2 + $0x68] sm:$0xff]
    %v114 = vld [vmem:[#allocation2 + $0x70] sm:$0xff]
    %v115 = vld [vmem:[#allocation2 + $0x78] sm:$0xff]
    %v116 = vld [vmem:[#allocation2 + $0x80] sm:$0xff]
    %v117 = vld [vmem:[#allocation2 + $0x88] sm:$0xff]
    %v118 = vld [vmem:[#allocation2 + $0x90] sm:$0xff]
    %v119 = vld [vmem:[#allocation2 + $0x98] sm:$0xff]
    %v120 = vld [vmem:[#allocation2 + $0xa0] sm:$0xff]
    %v121 = vld [vmem:[#allocation2 + $0xa8] sm:$0xff]
    %v122 = vld [vmem:[#allocation2 + $0xb0] sm:$0xff]
    %v123 = vld [vmem:[#allocation2 + $0xb8] sm:$0xff]
    %v124 = vld [vmem:[#allocation2 + $0xc0] sm:$0xff]
    %v125 = vld [vmem:[#allocation2 + $0xc8] sm:$0xff]
    %v126 = vld [vmem:[#allocation2 + $0xd0] sm:$0xff]
    %v127 = vld [vmem:[#allocation2 + $0xd8] sm:$0xff]
    %v128 = vld [vmem:[#allocation2 + $0xe0] sm:$0xff]
    %v129 = vld [vmem:[#allocation2 + $0xe8] sm:$0xff]
    %v130 = vld [vmem:[#allocation2 + $0xf0] sm:$0xff]
    %v131 = vld [vmem:[#allocation2 + $0xf8] sm:$0xff]
    %v132 = vld [vmem:[#allocation2 + $0x100] sm:$0xff]
    %v133 = vld [vmem:[#allocation2 + $0x108] sm:$0xff]
    %v134 = vld [vmem:[#allocation2 + $0x110] sm:$0xff]
    %v135 = vld [vmem:[#allocation2 + $0x118] sm:$0xff]
    %v136 = vld [vmem:[#allocation2 + $0x120] sm:$0xff]
    %v137 = vld [vmem:[#allocation2 + $0x128] sm:$0xff]
    %v138 = vld [vmem:[#allocation2 + $0x130] sm:$0xff]
    %v139 = vld [vmem:[#allocation2 + $0x138] sm:$0xff]
    %v140 = vld [vmem:[#allocation2 + $0x140] sm:$0xff]
    %v141 = vld [vmem:[#allocation2 + $0x148] sm:$0xff]
    %v142 = vld [vmem:[#allocation2 + $0x150] sm:$0xff]
    %v143 = vld [vmem:[#allocation2 + $0x158] sm:$0xff]
    %v144 = vld [vmem:[#allocation2 + $0x160] sm:$0xff]
    %v145 = vld [vmem:[#allocation2 + $0x168] sm:$0xff]
    %v146 = vld [vmem:[#allocation2 + $0x170] sm:$0xff]
    %v147 = vld [vmem:[#allocation2 + $0x178] sm:$0xff]
    %v148 = vld [vmem:[#allocation2 + $0x180] sm:$0xff]
    %v149 = vld [vmem:[#allocation2 + $0x188] sm:$0xff]
    %v150 = vld [vmem:[#allocation2 + $0x190] sm:$0xff]
    %v151 = vld [vmem:[#allocation2 + $0x198] sm:$0xff]
    %v152 = vld [vmem:[#allocation2 + $0x1a0] sm:$0xff]
    %v153 = vld [vmem:[#allocation2 + $0x1a8] sm:$0xff]
    %v154 = vld [vmem:[#allocation2 + $0x1b0] sm:$0xff]
    %v155 = vld [vmem:[#allocation2 + $0x1b8] sm:$0xff]
    %v156 = vld [vmem:[#allocation2 + $0x1c0] sm:$0xff]
    %v157 = vld [vmem:[#allocation2 + $0x1c8] sm:$0xff]
    %v158 = vld [vmem:[#allocation2 + $0x1d0] sm:$0xff]
    %v159 = vld [vmem:[#allocation2 + $0x1d8] sm:$0xff]
    %v160 = vld [vmem:[#allocation2 + $0x1e0] sm:$0xff]
    %v161 = vld [vmem:[#allocation2 + $0x1e8] sm:$0xff]
    %v162 = vld [vmem:[#allocation2 + $0x1f0] sm:$0xff]
    %v163 = vld [vmem:[#allocation2 + $0x1f8] sm:$0xff]
    %v228 = vunpack.c.l.b16 %v100
    %v229 = vunpack.c.h.b16 %v100
    %v230 = vunpack.c.l.b16 %v101
    %v231 = vunpack.c.h.b16 %v101
    %v232 = vunpack.c.l.b16 %v102
    %v233 = vunpack.c.h.b16 %v102
    %v234 = vunpack.c.l.b16 %v103
    %v235 = vunpack.c.h.b16 %v103
    %v236 = vunpack.c.l.b16 %v104
    %v237 = vunpack.c.h.b16 %v104
    %v238 = vunpack.c.l.b16 %v105
    %v239 = vunpack.c.h.b16 %v105
    %v240 = vunpack.c.l.b16 %v106
    %v241 = vunpack.c.h.b16 %v106
    %v242 = vunpack.c.l.b16 %v107
    %v243 = vunpack.c.h.b16 %v107
    %v244 = vunpack.c.l.b16 %v108
    %v245 = vunpack.c.h.b16 %v108
    %v246 = vunpack.c.l.b16 %v109
    %v247 = vunpack.c.h.b16 %v109
    %v248 = vunpack.c.l.b16 %v110
    %v249 = vunpack.c.h.b16 %v110
    %v250 = vunpack.c.l.b16 %v111
    %v251 = vunpack.c.h.b16 %v111
    %v252 = vunpack.c.l.b16 %v112
    %v253 = vunpack.c.h.b16 %v112
    %v254 = vunpack.c.l.b16 %v113
    %v255 = vunpack.c.h.b16 %v113
    %v256 = vunpack.c.l.b16 %v114
    %v257 = vunpack.c.h.b16 %v114
    %v258 = vunpack.c.l.b16 %v115
    %v259 = vunpack.c.h.b16 %v115
    %v260 = vunpack.c.l.b16 %v116
    %v261 = vunpack.c.h.b16 %v116
    %v262 = vunpack.c.l.b16 %v117
    %v263 = vunpack.c.h.b16 %v117
    %v264 = vunpack.c.l.b16 %v118
    %v265 = vunpack.c.h.b16 %v118
    %v266 = vunpack.c.l.b16 %v119
    %v267 = vunpack.c.h.b16 %v119
    %v268 = vunpack.c.l.b16 %v120
    %v269 = vunpack.c.h.b16 %v120
    %v270 = vunpack.c.l.b16 %v121
    %v271 = vunpack.c.h.b16 %v121
    %v272 = vunpack.c.l.b16 %v122
    %v273 = vunpack.c.h.b16 %v122
    %v274 = vunpack.c.l.b16 %v123
    %v275 = vunpack.c.h.b16 %v123
    %v276 = vunpack.c.l.b16 %v124
    %v277 = vunpack.c.h.b16 %v124
    %v278 = vunpack.c.l.b16 %v125
    %v279 = vunpack.c.h.b16 %v125
    %v280 = vunpack.c.l.b16 %v126
    %v281 = vunpack.c.h.b16 %v126
    %v282 = vunpack.c.l.b16 %v127
    %v283 = vunpack.c.h.b16 %v127
    %v284 = vunpack.c.l.b16 %v128
    %v285 = vunpack.c.h.b16 %v128
    %v286 = vunpack.c.l.b16 %v129
    %v287 = vunpack.c.h.b16 %v129
    %v288 = vunpack.c.l.b16 %v130
    %v289 = vunpack.c.h.b16 %v130
    %v290 = vunpack.c.l.b16 %v131
    %v291 = vunpack.c.h.b16 %v131
    %v292 = vunpack.c.l.b16 %v132
    %v293 = vunpack.c.h.b16 %v132
    %v294 = vunpack.c.l.b16 %v133
    %v295 = vunpack.c.h.b16 %v133
    %v296 = vunpack.c.l.b16 %v134
    %v297 = vunpack.c.h.b16 %v134
    %v298 = vunpack.c.l.b16 %v135
    %v299 = vunpack.c.h.b16 %v135
    %v300 = vunpack.c.l.b16 %v136
    %v301 = vunpack.c.h.b16 %v136
    %v302 = vunpack.c.l.b16 %v137
    %v303 = vunpack.c.h.b16 %v137
    %v304 = vunpack.c.l.b16 %v138
    %v305 = vunpack.c.h.b16 %v138
    %v306 = vunpack.c.l.b16 %v139
    %v307 = vunpack.c.h.b16 %v139
    %v308 = vunpack.c.l.b16 %v140
    %v309 = vunpack.c.h.b16 %v140
    %v310 = vunpack.c.l.b16 %v141
    %v311 = vunpack.c.h.b16 %v141
    %v312 = vunpack.c.l.b16 %v142
    %v313 = vunpack.c.h.b16 %v142
    %v314 = vunpack.c.l.b16 %v143
    %v315 = vunpack.c.h.b16 %v143
    %v316 = vunpack.c.l.b16 %v144
    %v317 = vunpack.c.h.b16 %v144
    %v318 = vunpack.c.l.b16 %v145
    %v319 = vunpack.c.h.b16 %v145
    %v320 = vunpack.c.l.b16 %v146
    %v321 = vunpack.c.h.b16 %v146
    %v322 = vunpack.c.l.b16 %v147
    %v323 = vunpack.c.h.b16 %v147
    %v324 = vunpack.c.l.b16 %v148
    %v325 = vunpack.c.h.b16 %v148
    %v326 = vunpack.c.l.b16 %v149
    %v327 = vunpack.c.h.b16 %v149
    %v328 = vunpack.c.l.b16 %v150
    %v329 = vunpack.c.h.b16 %v150
    %v330 = vunpack.c.l.b16 %v151
    %v331 = vunpack.c.h.b16 %v151
    %v332 = vunpack.c.l.b16 %v152
    %v333 = vunpack.c.h.b16 %v152
    %v334 = vunpack.c.l.b16 %v153
    %v335 = vunpack.c.h.b16 %v153
    %v336 = vunpack.c.l.b16 %v154
    %v337 = vunpack.c.h.b16 %v154
    %v338 = vunpack.c.l.b16 %v155
    %v339 = vunpack.c.h.b16 %v155
    %v340 = vunpack.c.l.b16 %v156
    %v341 = vunpack.c.h.b16 %v156
    %v342 = vunpack.c.l.b16 %v157
    %v343 = vunpack.c.h.b16 %v157
    %v344 = vunpack.c.l.b16 %v158
    %v345 = vunpack.c.h.b16 %v158
    %v346 = vunpack.c.l.b16 %v159
    %v347 = vunpack.c.h.b16 %v159
    %v348 = vunpack.c.l.b16 %v160
    %v349 = vunpack.c.h.b16 %v160
    %v350 = vunpack.c.l.b16 %v161
    %v351 = vunpack.c.h.b16 %v161
    %v352 = vunpack.c.l.b16 %v162
    %v353 = vunpack.c.h.b16 %v162
    %v354 = vunpack.c.l.b16 %v163
    %v355 = vunpack.c.h.b16 %v163
    %v356 = vpack.c.b16 %v232, %v228
    %v357 = vpack.c.b16 %v233, %v229
    %v358 = vpack.c.b16 %v234, %v230
    %v359 = vpack.c.b16 %v235, %v231
    %v360 = vpack.c.b16 %v240, %v236
    %v361 = vpack.c.b16 %v241, %v237
    %v362 = vpack.c.b16 %v242, %v238
    %v363 = vpack.c.b16 %v243, %v239
    %v364 = vpack.c.b16 %v248, %v244
    %v365 = vpack.c.b16 %v249, %v245
    %v366 = vpack.c.b16 %v250, %v246
    %v367 = vpack.c.b16 %v251, %v247
    %v368 = vpack.c.b16 %v256, %v252
    %v369 = vpack.c.b16 %v257, %v253
    %v370 = vpack.c.b16 %v258, %v254
    %v371 = vpack.c.b16 %v259, %v255
    %v372 = vpack.c.b16 %v264, %v260
    %v373 = vpack.c.b16 %v265, %v261
    %v374 = vpack.c.b16 %v266, %v262
    %v375 = vpack.c.b16 %v267, %v263
    %v376 = vpack.c.b16 %v272, %v268
    %v377 = vpack.c.b16 %v273, %v269
    %v378 = vpack.c.b16 %v274, %v270
    %v379 = vpack.c.b16 %v275, %v271
    %v380 = vpack.c.b16 %v280, %v276
    %v381 = vpack.c.b16 %v281, %v277
    %v382 = vpack.c.b16 %v282, %v278
    %v383 = vpack.c.b16 %v283, %v279
    %v384 = vpack.c.b16 %v288, %v284
    %v385 = vpack.c.b16 %v289, %v285
    %v386 = vpack.c.b16 %v290, %v286
    %v387 = vpack.c.b16 %v291, %v287
    %v388 = vpack.c.b16 %v296, %v292
    %v389 = vpack.c.b16 %v297, %v293
    %v390 = vpack.c.b16 %v298, %v294
    %v391 = vpack.c.b16 %v299, %v295
    %v392 = vpack.c.b16 %v304, %v300
    %v393 = vpack.c.b16 %v305, %v301
    %v394 = vpack.c.b16 %v306, %v302
    %v395 = vpack.c.b16 %v307, %v303
    %v396 = vpack.c.b16 %v312, %v308
    %v397 = vpack.c.b16 %v313, %v309
    %v398 = vpack.c.b16 %v314, %v310
    %v399 = vpack.c.b16 %v315, %v311
    %v400 = vpack.c.b16 %v320, %v316
    %v401 = vpack.c.b16 %v321, %v317
    %v402 = vpack.c.b16 %v322, %v318
    %v403 = vpack.c.b16 %v323, %v319
    %v404 = vpack.c.b16 %v328, %v324
    %v405 = vpack.c.b16 %v329, %v325
    %v406 = vpack.c.b16 %v330, %v326
    %v407 = vpack.c.b16 %v331, %v327
    %v408 = vpack.c.b16 %v336, %v332
    %v409 = vpack.c.b16 %v337, %v333
    %v410 = vpack.c.b16 %v338, %v334
    %v411 = vpack.c.b16 %v339, %v335
    %v412 = vpack.c.b16 %v344, %v340
    %v413 = vpack.c.b16 %v345, %v341
    %v414 = vpack.c.b16 %v346, %v342
    %v415 = vpack.c.b16 %v347, %v343
    %v416 = vpack.c.b16 %v352, %v348
    %v417 = vpack.c.b16 %v353, %v349
    %v418 = vpack.c.b16 %v354, %v350
    %v419 = vpack.c.b16 %v355, %v351
    %484 = vmatprep.subr.bf16.mxu0 %v357
    %485 = vmatpush1.bf16.msra.mxu0 %v356
    %486 = vmatprep.subr.bf16.mxu0 %v361
    %487 = vmatpush1.bf16.msra.mxu0 %v360
    %488 = vmatprep.subr.bf16.mxu0 %v365
    %489 = vmatpush1.bf16.msra.mxu0 %v364
    %490 = vmatprep.subr.bf16.mxu0 %v369
    %491 = vmatpush1.bf16.msra.mxu0 %v368
    %492 = vmatprep.subr.bf16.mxu0 %v373
    %493 = vmatpush1.bf16.msra.mxu0 %v372
    %494 = vmatprep.subr.bf16.mxu0 %v377
    %495 = vmatpush1.bf16.msra.mxu0 %v376
    %496 = vmatprep.subr.bf16.mxu0 %v381
    %497 = vmatpush1.bf16.msra.mxu0 %v380
    %498 = vmatprep.subr.bf16.mxu0 %v385
    %499 = vmatpush1.bf16.msra.mxu0 %v384
    %500 = vmatprep.subr.bf16.mxu0 %v389
    %501 = vmatpush1.bf16.msra.mxu0 %v388
    %502 = vmatprep.subr.bf16.mxu0 %v393
    %503 = vmatpush1.bf16.msra.mxu0 %v392
    %504 = vmatprep.subr.bf16.mxu0 %v397
    %505 = vmatpush1.bf16.msra.mxu0 %v396
    %506 = vmatprep.subr.bf16.mxu0 %v401
    %507 = vmatpush1.bf16.msra.mxu0 %v400
    %508 = vmatprep.subr.bf16.mxu0 %v405
    %509 = vmatpush1.bf16.msra.mxu0 %v404
    %510 = vmatprep.subr.bf16.mxu0 %v409
    %511 = vmatpush1.bf16.msra.mxu0 %v408
    %512 = vmatprep.subr.bf16.mxu0 %v413
    %513 = vmatpush1.bf16.msra.mxu0 %v412
    %514 = vmatprep.subr.bf16.mxu0 %v417
    %515 = vmatpush1.bf16.msra.mxu0 %v416
    %516 = vmatprep.mubr.bf16.mxu0 %v91
    %517 = vmatmul.mubr.bf16.gmra.mrb[0].mxu0 %v98
    %v518 = vpop.f32.mrb[0].mxu0
    %v519 = vadd.f32 0.0, %v518
    %v520 = vpop.f32.mrb[0].mxu0
    %v521 = vadd.f32 0.0, %v520
    %v522 = vpop.f32.mrb[0].mxu0
    %v523 = vadd.f32 0.0, %v522
    %v524 = vpop.f32.mrb[0].mxu0
    %v525 = vadd.f32 0.0, %v524
    %526 = vdwg.mxu0
    %527 = vmatprep.subr.bf16.mxu0 %v359
    %528 = vmatpush1.bf16.msra.mxu0 %v358
    %529 = vmatprep.subr.bf16.mxu0 %v363
    %530 = vmatpush1.bf16.msra.mxu0 %v362
    %531 = vmatprep.subr.bf16.mxu0 %v367
    %532 = vmatpush1.bf16.msra.mxu0 %v366
    %533 = vmatprep.subr.bf16.mxu0 %v371
    %534 = vmatpush1.bf16.msra.mxu0 %v370
    %535 = vmatprep.subr.bf16.mxu0 %v375
    %536 = vmatpush1.bf16.msra.mxu0 %v374
    %537 = vmatprep.subr.bf16.mxu0 %v379
    %538 = vmatpush1.bf16.msra.mxu0 %v378
    %539 = vmatprep.subr.bf16.mxu0 %v383
    %540 = vmatpush1.bf16.msra.mxu0 %v382
    %541 = vmatprep.subr.bf16.mxu0 %v387
    %542 = vmatpush1.bf16.msra.mxu0 %v386
    %543 = vmatprep.subr.bf16.mxu0 %v391
    %544 = vmatpush1.bf16.msra.mxu0 %v390
    %545 = vmatprep.subr.bf16.mxu0 %v395
    %546 = vmatpush1.bf16.msra.mxu0 %v394
    %547 = vmatprep.subr.bf16.mxu0 %v399
    %548 = vmatpush1.bf16.msra.mxu0 %v398
    %549 = vmatprep.subr.bf16.mxu0 %v403
    %550 = vmatpush1.bf16.msra.mxu0 %v402
    %551 = vmatprep.subr.bf16.mxu0 %v407
    %552 = vmatpush1.bf16.msra.mxu0 %v406
    %553 = vmatprep.subr.bf16.mxu0 %v411
    %554 = vmatpush1.bf16.msra.mxu0 %v410
    %555 = vmatprep.subr.bf16.mxu0 %v415
    %556 = vmatpush1.bf16.msra.mxu0 %v414
    %557 = vmatprep.subr.bf16.mxu0 %v419
    %558 = vmatpush1.bf16.msra.mxu0 %v418
    %559 = vmatprep.mubr.bf16.mxu0 %v91
    %560 = vmatmul.mubr.bf16.gmra.mrb[0].mxu0 %v98
    %v561 = vpop.f32.mrb[0].mxu0
    %v562 = vadd.f32 0.0, %v561
    %v563 = vpop.f32.mrb[0].mxu0
    %v564 = vadd.f32 0.0, %v563
    %v565 = vpop.f32.mrb[0].mxu0
    %v566 = vadd.f32 0.0, %v565
    %v567 = vpop.f32.mrb[0].mxu0
    %v568 = vadd.f32 0.0, %v567
    %569 = vdwg.mxu0
    %v570 = vpack.c.bf16 %v523, %v519
    %v571 = vpack.c.bf16 %v525, %v521
    %v572 = vpack.c.bf16 %v566, %v562
    %v573 = vpack.c.bf16 %v568, %v564
    %vm574 = vcmp.gt.bf16.partialorder %v570, 0
    %vm575 = vcmp.gt.bf16.partialorder %v571, 0
    %vm576 = vcmp.gt.bf16.partialorder %v572, 0
    %vm577 = vcmp.gt.bf16.partialorder %v573, 0
    %v578 = vmul.bf16 %v570, 1045249613
    %v579 = vmul.bf16 %v571, 1045249613
    %v580 = vmul.bf16 %v572, 1045249613
    %v581 = vmul.bf16 %v573, 1045249613
    %v582 = vsel %vm574, %v570, %v578
    %v583 = vsel %vm575, %v571, %v579
    %v584 = vsel %vm576, %v572, %v580
    %v585 = vsel %vm577, %v573, %v581
    %v586 = vld [vmem:[#allocation4] sm:$0xff]
    %v587 = vld [vmem:[#allocation4 + $0x8] sm:$0xff]
    %v588 = vld [vmem:[#allocation4 + $0x10] sm:$0xff]
    %v589 = vld [vmem:[#allocation4 + $0x18] sm:$0xff]
    %v590 = vld [vmem:[#allocation4 + $0x20] sm:$0xff]
    %v591 = vld [vmem:[#allocation4 + $0x28] sm:$0xff]
    %v592 = vld [vmem:[#allocation4 + $0x30] sm:$0xff]
    %v593 = vld [vmem:[#allocation4 + $0x38] sm:$0xff]
    %v594 = vld [vmem:[#allocation4 + $0x40] sm:$0xff]
    %v595 = vld [vmem:[#allocation4 + $0x48] sm:$0xff]
    %v596 = vld [vmem:[#allocation4 + $0x50] sm:$0xff]
    %v597 = vld [vmem:[#allocation4 + $0x58] sm:$0xff]
    %v598 = vld [vmem:[#allocation4 + $0x60] sm:$0xff]
    %v599 = vld [vmem:[#allocation4 + $0x68] sm:$0xff]
    %v600 = vld [vmem:[#allocation4 + $0x70] sm:$0xff]
    %v601 = vld [vmem:[#allocation4 + $0x78] sm:$0xff]
    %v602 = vld [vmem:[#allocation4 + $0x80] sm:$0xff]
    %v603 = vld [vmem:[#allocation4 + $0x88] sm:$0xff]
    %v604 = vld [vmem:[#allocation4 + $0x90] sm:$0xff]
    %v605 = vld [vmem:[#allocation4 + $0x98] sm:$0xff]
    %v606 = vld [vmem:[#allocation4 + $0xa0] sm:$0xff]
    %v607 = vld [vmem:[#allocation4 + $0xa8] sm:$0xff]
    %v608 = vld [vmem:[#allocation4 + $0xb0] sm:$0xff]
    %v609 = vld [vmem:[#allocation4 + $0xb8] sm:$0xff]
    %v610 = vld [vmem:[#allocation4 + $0xc0] sm:$0xff]
    %v611 = vld [vmem:[#allocation4 + $0xc8] sm:$0xff]
    %v612 = vld [vmem:[#allocation4 + $0xd0] sm:$0xff]
    %v613 = vld [vmem:[#allocation4 + $0xd8] sm:$0xff]
    %v614 = vld [vmem:[#allocation4 + $0xe0] sm:$0xff]
    %v615 = vld [vmem:[#allocation4 + $0xe8] sm:$0xff]
    %v616 = vld [vmem:[#allocation4 + $0xf0] sm:$0xff]
    %v617 = vld [vmem:[#allocation4 + $0xf8] sm:$0xff]
    %v618 = vld [vmem:[#allocation4 + $0x100] sm:$0xff]
    %v619 = vld [vmem:[#allocation4 + $0x108] sm:$0xff]
    %v620 = vld [vmem:[#allocation4 + $0x110] sm:$0xff]
    %v621 = vld [vmem:[#allocation4 + $0x118] sm:$0xff]
    %v622 = vld [vmem:[#allocation4 + $0x120] sm:$0xff]
    %v623 = vld [vmem:[#allocation4 + $0x128] sm:$0xff]
    %v624 = vld [vmem:[#allocation4 + $0x130] sm:$0xff]
    %v625 = vld [vmem:[#allocation4 + $0x138] sm:$0xff]
    %v626 = vld [vmem:[#allocation4 + $0x140] sm:$0xff]
    %v627 = vld [vmem:[#allocation4 + $0x148] sm:$0xff]
    %v628 = vld [vmem:[#allocation4 + $0x150] sm:$0xff]
    %v629 = vld [vmem:[#allocation4 + $0x158] sm:$0xff]
    %v630 = vld [vmem:[#allocation4 + $0x160] sm:$0xff]
    %v631 = vld [vmem:[#allocation4 + $0x168] sm:$0xff]
    %v632 = vld [vmem:[#allocation4 + $0x170] sm:$0xff]
    %v633 = vld [vmem:[#allocation4 + $0x178] sm:$0xff]
    %v634 = vld [vmem:[#allocation4 + $0x180] sm:$0xff]
    %v635 = vld [vmem:[#allocation4 + $0x188] sm:$0xff]
    %v636 = vld [vmem:[#allocation4 + $0x190] sm:$0xff]
    %v637 = vld [vmem:[#allocation4 + $0x198] sm:$0xff]
    %v638 = vld [vmem:[#allocation4 + $0x1a0] sm:$0xff]
    %v639 = vld [vmem:[#allocation4 + $0x1a8] sm:$0xff]
    %v640 = vld [vmem:[#allocation4 + $0x1b0] sm:$0xff]
    %v641 = vld [vmem:[#allocation4 + $0x1b8] sm:$0xff]
    %v642 = vld [vmem:[#allocation4 + $0x1c0] sm:$0xff]
    %v643 = vld [vmem:[#allocation4 + $0x1c8] sm:$0xff]
    %v644 = vld [vmem:[#allocation4 + $0x1d0] sm:$0xff]
    %v645 = vld [vmem:[#allocation4 + $0x1d8] sm:$0xff]
    %v646 = vld [vmem:[#allocation4 + $0x1e0] sm:$0xff]
    %v647 = vld [vmem:[#allocation4 + $0x1e8] sm:$0xff]
    %v648 = vld [vmem:[#allocation4 + $0x1f0] sm:$0xff]
    %v649 = vld [vmem:[#allocation4 + $0x1f8] sm:$0xff]
    %v650 = vld [vmem:[%s4] sm:$0x3]
    %v652 = vlaneseq
    %v653 = vshrl.u32 %v652, 7
    %v654 = vsub.s32 0, %v653
    %v655 = vrot.slane %v650, %v654
    %v656 = vlaneseq
    %v657 = vshrl.u32 %v656, 7
    %v658 = vsub.s32 1, %v657
    %v659 = vrot.slane %v650, %v658
    %v726 = vunpack.c.l.b16 %v586
    %v727 = vunpack.c.h.b16 %v586
    %v728 = vunpack.c.l.b16 %v587
    %v729 = vunpack.c.h.b16 %v587
    %v730 = vunpack.c.l.b16 %v588
    %v731 = vunpack.c.h.b16 %v588
    %v732 = vunpack.c.l.b16 %v589
    %v733 = vunpack.c.h.b16 %v589
    %v734 = vunpack.c.l.b16 %v590
    %v735 = vunpack.c.h.b16 %v590
    %v736 = vunpack.c.l.b16 %v591
    %v737 = vunpack.c.h.b16 %v591
    %v738 = vunpack.c.l.b16 %v592
    %v739 = vunpack.c.h.b16 %v592
    %v740 = vunpack.c.l.b16 %v593
    %v741 = vunpack.c.h.b16 %v593
    %v742 = vunpack.c.l.b16 %v594
    %v743 = vunpack.c.h.b16 %v594
    %v744 = vunpack.c.l.b16 %v595
    %v745 = vunpack.c.h.b16 %v595
    %v746 = vunpack.c.l.b16 %v596
    %v747 = vunpack.c.h.b16 %v596
    %v748 = vunpack.c.l.b16 %v597
    %v749 = vunpack.c.h.b16 %v597
    %v750 = vunpack.c.l.b16 %v598
    %v751 = vunpack.c.h.b16 %v598
    %v752 = vunpack.c.l.b16 %v599
    %v753 = vunpack.c.h.b16 %v599
    %v754 = vunpack.c.l.b16 %v600
    %v755 = vunpack.c.h.b16 %v600
    %v756 = vunpack.c.l.b16 %v601
    %v757 = vunpack.c.h.b16 %v601
    %v758 = vunpack.c.l.b16 %v602
    %v759 = vunpack.c.h.b16 %v602
    %v760 = vunpack.c.l.b16 %v603
    %v761 = vunpack.c.h.b16 %v603
    %v762 = vunpack.c.l.b16 %v604
    %v763 = vunpack.c.h.b16 %v604
    %v764 = vunpack.c.l.b16 %v605
    %v765 = vunpack.c.h.b16 %v605
    %v766 = vunpack.c.l.b16 %v606
    %v767 = vunpack.c.h.b16 %v606
    %v768 = vunpack.c.l.b16 %v607
    %v769 = vunpack.c.h.b16 %v607
    %v770 = vunpack.c.l.b16 %v608
    %v771 = vunpack.c.h.b16 %v608
    %v772 = vunpack.c.l.b16 %v609
    %v773 = vunpack.c.h.b16 %v609
    %v774 = vunpack.c.l.b16 %v610
    %v775 = vunpack.c.h.b16 %v610
    %v776 = vunpack.c.l.b16 %v611
    %v777 = vunpack.c.h.b16 %v611
    %v778 = vunpack.c.l.b16 %v612
    %v779 = vunpack.c.h.b16 %v612
    %v780 = vunpack.c.l.b16 %v613
    %v781 = vunpack.c.h.b16 %v613
    %v782 = vunpack.c.l.b16 %v614
    %v783 = vunpack.c.h.b16 %v614
    %v784 = vunpack.c.l.b16 %v615
    %v785 = vunpack.c.h.b16 %v615
    %v786 = vunpack.c.l.b16 %v616
    %v787 = vunpack.c.h.b16 %v616
    %v788 = vunpack.c.l.b16 %v617
    %v789 = vunpack.c.h.b16 %v617
    %v790 = vunpack.c.l.b16 %v618
    %v791 = vunpack.c.h.b16 %v618
    %v792 = vunpack.c.l.b16 %v619
    %v793 = vunpack.c.h.b16 %v619
    %v794 = vunpack.c.l.b16 %v620
    %v795 = vunpack.c.h.b16 %v620
    %v796 = vunpack.c.l.b16 %v621
    %v797 = vunpack.c.h.b16 %v621
    %v798 = vunpack.c.l.b16 %v622
    %v799 = vunpack.c.h.b16 %v622
    %v800 = vunpack.c.l.b16 %v623
    %v801 = vunpack.c.h.b16 %v623
    %v802 = vunpack.c.l.b16 %v624
    %v803 = vunpack.c.h.b16 %v624
    %v804 = vunpack.c.l.b16 %v625
    %v805 = vunpack.c.h.b16 %v625
    %v806 = vunpack.c.l.b16 %v626
    %v807 = vunpack.c.h.b16 %v626
    %v808 = vunpack.c.l.b16 %v627
    %v809 = vunpack.c.h.b16 %v627
    %v810 = vunpack.c.l.b16 %v628
    %v811 = vunpack.c.h.b16 %v628
    %v812 = vunpack.c.l.b16 %v629
    %v813 = vunpack.c.h.b16 %v629
    %v814 = vunpack.c.l.b16 %v630
    %v815 = vunpack.c.h.b16 %v630
    %v816 = vunpack.c.l.b16 %v631
    %v817 = vunpack.c.h.b16 %v631
    %v818 = vunpack.c.l.b16 %v632
    %v819 = vunpack.c.h.b16 %v632
    %v820 = vunpack.c.l.b16 %v633
    %v821 = vunpack.c.h.b16 %v633
    %v822 = vunpack.c.l.b16 %v634
    %v823 = vunpack.c.h.b16 %v634
    %v824 = vunpack.c.l.b16 %v635
    %v825 = vunpack.c.h.b16 %v635
    %v826 = vunpack.c.l.b16 %v636
    %v827 = vunpack.c.h.b16 %v636
    %v828 = vunpack.c.l.b16 %v637
    %v829 = vunpack.c.h.b16 %v637
    %v830 = vunpack.c.l.b16 %v638
    %v831 = vunpack.c.h.b16 %v638
    %v832 = vunpack.c.l.b16 %v639
    %v833 = vunpack.c.h.b16 %v639
    %v834 = vunpack.c.l.b16 %v640
    %v835 = vunpack.c.h.b16 %v640
    %v836 = vunpack.c.l.b16 %v641
    %v837 = vunpack.c.h.b16 %v641
    %v838 = vunpack.c.l.b16 %v642
    %v839 = vunpack.c.h.b16 %v642
    %v840 = vunpack.c.l.b16 %v643
    %v841 = vunpack.c.h.b16 %v643
    %v842 = vunpack.c.l.b16 %v644
    %v843 = vunpack.c.h.b16 %v644
    %v844 = vunpack.c.l.b16 %v645
    %v845 = vunpack.c.h.b16 %v645
    %v846 = vunpack.c.l.b16 %v646
    %v847 = vunpack.c.h.b16 %v646
    %v848 = vunpack.c.l.b16 %v647
    %v849 = vunpack.c.h.b16 %v647
    %v850 = vunpack.c.l.b16 %v648
    %v851 = vunpack.c.h.b16 %v648
    %v852 = vunpack.c.l.b16 %v649
    %v853 = vunpack.c.h.b16 %v649
    %v854 = vpack.c.b16 %v728, %v726
    %v855 = vpack.c.b16 %v729, %v727
    %v856 = vpack.c.b16 %v732, %v730
    %v857 = vpack.c.b16 %v733, %v731
    %v858 = vpack.c.b16 %v736, %v734
    %v859 = vpack.c.b16 %v737, %v735
    %v860 = vpack.c.b16 %v740, %v738
    %v861 = vpack.c.b16 %v741, %v739
    %v862 = vpack.c.b16 %v744, %v742
    %v863 = vpack.c.b16 %v745, %v743
    %v864 = vpack.c.b16 %v748, %v746
    %v865 = vpack.c.b16 %v749, %v747
    %v866 = vpack.c.b16 %v752, %v750
    %v867 = vpack.c.b16 %v753, %v751
    %v868 = vpack.c.b16 %v756, %v754
    %v869 = vpack.c.b16 %v757, %v755
    %v870 = vpack.c.b16 %v760, %v758
    %v871 = vpack.c.b16 %v761, %v759
    %v872 = vpack.c.b16 %v764, %v762
    %v873 = vpack.c.b16 %v765, %v763
    %v874 = vpack.c.b16 %v768, %v766
    %v875 = vpack.c.b16 %v769, %v767
    %v876 = vpack.c.b16 %v772, %v770
    %v877 = vpack.c.b16 %v773, %v771
    %v878 = vpack.c.b16 %v776, %v774
    %v879 = vpack.c.b16 %v777, %v775
    %v880 = vpack.c.b16 %v780, %v778
    %v881 = vpack.c.b16 %v781, %v779
    %v882 = vpack.c.b16 %v784, %v782
    %v883 = vpack.c.b16 %v785, %v783
    %v884 = vpack.c.b16 %v788, %v786
    %v885 = vpack.c.b16 %v789, %v787
    %v886 = vpack.c.b16 %v792, %v790
    %v887 = vpack.c.b16 %v793, %v791
    %v888 = vpack.c.b16 %v796, %v794
    %v889 = vpack.c.b16 %v797, %v795
    %v890 = vpack.c.b16 %v800, %v798
    %v891 = vpack.c.b16 %v801, %v799
    %v892 = vpack.c.b16 %v804, %v802
    %v893 = vpack.c.b16 %v805, %v803
    %v894 = vpack.c.b16 %v808, %v806
    %v895 = vpack.c.b16 %v809, %v807
    %v896 = vpack.c.b16 %v812, %v810
    %v897 = vpack.c.b16 %v813, %v811
    %v898 = vpack.c.b16 %v816, %v814
    %v899 = vpack.c.b16 %v817, %v815
    %v900 = vpack.c.b16 %v820, %v818
    %v901 = vpack.c.b16 %v821, %v819
    %v902 = vpack.c.b16 %v824, %v822
    %v903 = vpack.c.b16 %v825, %v823
    %v904 = vpack.c.b16 %v828, %v826
    %v905 = vpack.c.b16 %v829, %v827
    %v906 = vpack.c.b16 %v832, %v830
    %v907 = vpack.c.b16 %v833, %v831
    %v908 = vpack.c.b16 %v836, %v834
    %v909 = vpack.c.b16 %v837, %v835
    %v910 = vpack.c.b16 %v840, %v838
    %v911 = vpack.c.b16 %v841, %v839
    %v912 = vpack.c.b16 %v844, %v842
    %v913 = vpack.c.b16 %v845, %v843
    %v914 = vpack.c.b16 %v848, %v846
    %v915 = vpack.c.b16 %v849, %v847
    %v916 = vpack.c.b16 %v852, %v850
    %v917 = vpack.c.b16 %v853, %v851
    %982 = vmatprep.subr.bf16.mxu0 %v855
    %983 = vmatpush1.bf16.msra.mxu0 %v854
    %984 = vmatprep.subr.bf16.mxu0 %v857
    %985 = vmatpush1.bf16.msra.mxu0 %v856
    %986 = vmatprep.subr.bf16.mxu0 %v859
    %987 = vmatpush1.bf16.msra.mxu0 %v858
    %988 = vmatprep.subr.bf16.mxu0 %v861
    %989 = vmatpush1.bf16.msra.mxu0 %v860
    %990 = vmatprep.subr.bf16.mxu0 %v863
    %991 = vmatpush1.bf16.msra.mxu0 %v862
    %992 = vmatprep.subr.bf16.mxu0 %v865
    %993 = vmatpush1.bf16.msra.mxu0 %v864
    %994 = vmatprep.subr.bf16.mxu0 %v867
    %995 = vmatpush1.bf16.msra.mxu0 %v866
    %996 = vmatprep.subr.bf16.mxu0 %v869
    %997 = vmatpush1.bf16.msra.mxu0 %v868
    %998 = vmatprep.subr.bf16.mxu0 %v871
    %999 = vmatpush1.bf16.msra.mxu0 %v870
    %1000 = vmatprep.subr.bf16.mxu0 %v873
    %1001 = vmatpush1.bf16.msra.mxu0 %v872
    %1002 = vmatprep.subr.bf16.mxu0 %v875
    %1003 = vmatpush1.bf16.msra.mxu0 %v874
    %1004 = vmatprep.subr.bf16.mxu0 %v877
    %1005 = vmatpush1.bf16.msra.mxu0 %v876
    %1006 = vmatprep.subr.bf16.mxu0 %v879
    %1007 = vmatpush1.bf16.msra.mxu0 %v878
    %1008 = vmatprep.subr.bf16.mxu0 %v881
    %1009 = vmatpush1.bf16.msra.mxu0 %v880
    %1010 = vmatprep.subr.bf16.mxu0 %v883
    %1011 = vmatpush1.bf16.msra.mxu0 %v882
    %1012 = vmatprep.subr.bf16.mxu0 %v885
    %1013 = vmatpush1.bf16.msra.mxu0 %v884
    %1014 = vmatprep.mubr.bf16.mxu0 %v583
    %1015 = vmatmul.mubr.bf16.gmra.mrb[0].mxu0 %v582
    %v1016 = vpop.f32.mrb[0].mxu0
    %v1017 = vadd.f32 %v655, %v1016
    %v1018 = vpop.f32.mrb[0].mxu0
    %v1019 = vadd.f32 %v659, %v1018
    %v1020 = vpop.f32.mrb[0].mxu0
    %v1021 = vadd.f32 %v655, %v1020
    %v1022 = vpop.f32.mrb[0].mxu0
    %v1023 = vadd.f32 %v659, %v1022
    %1024 = vdwg.mxu0
    %1025 = vmatprep.subr.bf16.mxu0 %v887
    %1026 = vmatpush1.bf16.msra.mxu0 %v886
    %1027 = vmatprep.subr.bf16.mxu0 %v889
    %1028 = vmatpush1.bf16.msra.mxu0 %v888
    %1029 = vmatprep.subr.bf16.mxu0 %v891
    %1030 = vmatpush1.bf16.msra.mxu0 %v890
    %1031 = vmatprep.subr.bf16.mxu0 %v893
    %1032 = vmatpush1.bf16.msra.mxu0 %v892
    %1033 = vmatprep.subr.bf16.mxu0 %v895
    %1034 = vmatpush1.bf16.msra.mxu0 %v894
    %1035 = vmatprep.subr.bf16.mxu0 %v897
    %1036 = vmatpush1.bf16.msra.mxu0 %v896
    %1037 = vmatprep.subr.bf16.mxu0 %v899
    %1038 = vmatpush1.bf16.msra.mxu0 %v898
    %1039 = vmatprep.subr.bf16.mxu0 %v901
    %1040 = vmatpush1.bf16.msra.mxu0 %v900
    %1041 = vmatprep.subr.bf16.mxu0 %v903
    %1042 = vmatpush1.bf16.msra.mxu0 %v902
    %1043 = vmatprep.subr.bf16.mxu0 %v905
    %1044 = vmatpush1.bf16.msra.mxu0 %v904
    %1045 = vmatprep.subr.bf16.mxu0 %v907
    %1046 = vmatpush1.bf16.msra.mxu0 %v906
    %1047 = vmatprep.subr.bf16.mxu0 %v909
    %1048 = vmatpush1.bf16.msra.mxu0 %v908
    %1049 = vmatprep.subr.bf16.mxu0 %v911
    %1050 = vmatpush1.bf16.msra.mxu0 %v910
    %1051 = vmatprep.subr.bf16.mxu0 %v913
    %1052 = vmatpush1.bf16.msra.mxu0 %v912
    %1053 = vmatprep.subr.bf16.mxu0 %v915
    %1054 = vmatpush1.bf16.msra.mxu0 %v914
    %1055 = vmatprep.subr.bf16.mxu0 %v917
    %1056 = vmatpush1.bf16.msra.mxu0 %v916
    %1057 = vmatprep.mubr.bf16.mxu0 %v585
    %1058 = vmatmul.mubr.bf16.gmra.mrb[0].mxu0 %v584
    %v1059 = vpop.f32.mrb[0].mxu0
    %v1060 = vadd.f32 %v1017, %v1059
    %v1061 = vpop.f32.mrb[0].mxu0
    %v1062 = vadd.f32 %v1019, %v1061
    %v1063 = vpop.f32.mrb[0].mxu0
    %v1064 = vadd.f32 %v1021, %v1063
    %v1065 = vpop.f32.mrb[0].mxu0
    %v1066 = vadd.f32 %v1023, %v1065
    %1067 = vdwg.mxu0
    %v1068 = vpack.c.bf16 %v1064, %v1060
    %v1069 = vpack.c.bf16 %v1066, %v1062
    %vm1070 = vcmp.gt.bf16.partialorder %v1068, 0
    %vm1071 = vcmp.gt.bf16.partialorder %v1069, 0
    %v1072 = vmul.bf16 %v1068, 1045249613
    %v1073 = vmul.bf16 %v1069, 1045249613
    %v1074 = vsel %vm1070, %v1068, %v1072
    %v1075 = vsel %vm1071, %v1069, %v1073
    %v1076 = vld [vmem:[#allocation6] sm:$0xf]
    %v1077 = vld [vmem:[#allocation6 + $0x4] sm:$0xf]
    %v1078 = vld [vmem:[#allocation6 + $0x8] sm:$0xf]
    %v1079 = vld [vmem:[#allocation6 + $0xc] sm:$0xf]
    %v1080 = vld [vmem:[#allocation6 + $0x10] sm:$0xf]
    %v1081 = vld [vmem:[#allocation6 + $0x14] sm:$0xf]
    %v1082 = vld [vmem:[#allocation6 + $0x18] sm:$0xf]
    %v1083 = vld [vmem:[#allocation6 + $0x1c] sm:$0xf]
    %v1084 = vld [vmem:[#allocation6 + $0x20] sm:$0xf]
    %v1085 = vld [vmem:[#allocation6 + $0x24] sm:$0xf]
    %v1086 = vld [vmem:[#allocation6 + $0x28] sm:$0xf]
    %v1087 = vld [vmem:[#allocation6 + $0x2c] sm:$0xf]
    %v1088 = vld [vmem:[#allocation6 + $0x30] sm:$0xf]
    %v1089 = vld [vmem:[#allocation6 + $0x34] sm:$0xf]
    %v1090 = vld [vmem:[#allocation6 + $0x38] sm:$0xf]
    %v1091 = vld [vmem:[#allocation6 + $0x3c] sm:$0xf]
    %v1092 = vld [vmem:[#allocation6 + $0x40] sm:$0xf]
    %v1093 = vld [vmem:[#allocation6 + $0x44] sm:$0xf]
    %v1094 = vld [vmem:[#allocation6 + $0x48] sm:$0xf]
    %v1095 = vld [vmem:[#allocation6 + $0x4c] sm:$0xf]
    %v1096 = vld [vmem:[#allocation6 + $0x50] sm:$0xf]
    %v1097 = vld [vmem:[#allocation6 + $0x54] sm:$0xf]
    %v1098 = vld [vmem:[#allocation6 + $0x58] sm:$0xf]
    %v1099 = vld [vmem:[#allocation6 + $0x5c] sm:$0xf]
    %v1100 = vld [vmem:[#allocation6 + $0x60] sm:$0xf]
    %v1101 = vld [vmem:[#allocation6 + $0x64] sm:$0xf]
    %v1102 = vld [vmem:[#allocation6 + $0x68] sm:$0xf]
    %v1103 = vld [vmem:[#allocation6 + $0x6c] sm:$0xf]
    %v1104 = vld [vmem:[#allocation6 + $0x70] sm:$0xf]
    %v1105 = vld [vmem:[#allocation6 + $0x74] sm:$0xf]
    %v1106 = vld [vmem:[#allocation6 + $0x78] sm:$0xf]
    %v1107 = vld [vmem:[#allocation6 + $0x7c] sm:$0xf]
    %v1108 = vld [vmem:[%s6] sm:$0x1]
    %v1110 = vlaneseq
    %v1111 = vshrl.u32 %v1110, 7
    %v1112 = vsub.s32 0, %v1111
    %v1113 = vrot.slane %v1108, %v1112
    %v1147 = vunpack.c.l.b16 %v1076
    %v1148 = vunpack.c.l.b16 %v1077
    %v1149 = vunpack.c.l.b16 %v1078
    %v1150 = vunpack.c.l.b16 %v1079
    %v1151 = vunpack.c.l.b16 %v1080
    %v1152 = vunpack.c.l.b16 %v1081
    %v1153 = vunpack.c.l.b16 %v1082
    %v1154 = vunpack.c.l.b16 %v1083
    %v1155 = vunpack.c.l.b16 %v1084
    %v1156 = vunpack.c.l.b16 %v1085
    %v1157 = vunpack.c.l.b16 %v1086
    %v1158 = vunpack.c.l.b16 %v1087
    %v1159 = vunpack.c.l.b16 %v1088
    %v1160 = vunpack.c.l.b16 %v1089
    %v1161 = vunpack.c.l.b16 %v1090
    %v1162 = vunpack.c.l.b16 %v1091
    %v1163 = vunpack.c.l.b16 %v1092
    %v1164 = vunpack.c.l.b16 %v1093
    %v1165 = vunpack.c.l.b16 %v1094
    %v1166 = vunpack.c.l.b16 %v1095
    %v1167 = vunpack.c.l.b16 %v1096
    %v1168 = vunpack.c.l.b16 %v1097
    %v1169 = vunpack.c.l.b16 %v1098
    %v1170 = vunpack.c.l.b16 %v1099
    %v1171 = vunpack.c.l.b16 %v1100
    %v1172 = vunpack.c.l.b16 %v1101
    %v1173 = vunpack.c.l.b16 %v1102
    %v1174 = vunpack.c.l.b16 %v1103
    %v1175 = vunpack.c.l.b16 %v1104
    %v1176 = vunpack.c.l.b16 %v1105
    %v1177 = vunpack.c.l.b16 %v1106
    %v1178 = vunpack.c.l.b16 %v1107
    %v1179 = vpack.c.b16 %v1148, %v1147
    %v1180 = vpack.c.b16 %v1150, %v1149
    %v1181 = vpack.c.b16 %v1152, %v1151
    %v1182 = vpack.c.b16 %v1154, %v1153
    %v1183 = vpack.c.b16 %v1156, %v1155
    %v1184 = vpack.c.b16 %v1158, %v1157
    %v1185 = vpack.c.b16 %v1160, %v1159
    %v1186 = vpack.c.b16 %v1162, %v1161
    %v1187 = vpack.c.b16 %v1164, %v1163
    %v1188 = vpack.c.b16 %v1166, %v1165
    %v1189 = vpack.c.b16 %v1168, %v1167
    %v1190 = vpack.c.b16 %v1170, %v1169
    %v1191 = vpack.c.b16 %v1172, %v1171
    %v1192 = vpack.c.b16 %v1174, %v1173
    %v1193 = vpack.c.b16 %v1176, %v1175
    %v1194 = vpack.c.b16 %v1178, %v1177
    %1211 = vmatprep.subr.bf16.mxu0 0
    %1212 = vmatpush1.bf16.msra.mxu0 %v1179
    %1213 = vmatprep.subr.bf16.mxu0 0
    %1214 = vmatpush1.bf16.msra.mxu0 %v1180
    %1215 = vmatprep.subr.bf16.mxu0 0
    %1216 = vmatpush1.bf16.msra.mxu0 %v1181
    %1217 = vmatprep.subr.bf16.mxu0 0
    %1218 = vmatpush1.bf16.msra.mxu0 %v1182
    %1219 = vmatprep.subr.bf16.mxu0 0
    %1220 = vmatpush1.bf16.msra.mxu0 %v1183
    %1221 = vmatprep.subr.bf16.mxu0 0
    %1222 = vmatpush1.bf16.msra.mxu0 %v1184
    %1223 = vmatprep.subr.bf16.mxu0 0
    %1224 = vmatpush1.bf16.msra.mxu0 %v1185
    %1225 = vmatprep.subr.bf16.mxu0 0
    %1226 = vmatpush1.bf16.msra.mxu0 %v1186
    %1227 = vmatprep.subr.bf16.mxu0 0
    %1228 = vmatpush1.bf16.msra.mxu0 %v1187
    %1229 = vmatprep.subr.bf16.mxu0 0
    %1230 = vmatpush1.bf16.msra.mxu0 %v1188
    %1231 = vmatprep.subr.bf16.mxu0 0
    %1232 = vmatpush1.bf16.msra.mxu0 %v1189
    %1233 = vmatprep.subr.bf16.mxu0 0
    %1234 = vmatpush1.bf16.msra.mxu0 %v1190
    %1235 = vmatprep.subr.bf16.mxu0 0
    %1236 = vmatpush1.bf16.msra.mxu0 %v1191
    %1237 = vmatprep.subr.bf16.mxu0 0
    %1238 = vmatpush1.bf16.msra.mxu0 %v1192
    %1239 = vmatprep.subr.bf16.mxu0 0
    %1240 = vmatpush1.bf16.msra.mxu0 %v1193
    %1241 = vmatprep.subr.bf16.mxu0 0
    %1242 = vmatpush1.bf16.msra.mxu0 %v1194
    %1243 = vmatprep.mubr.bf16.mxu0 %v1075
    %1244 = vmatmul.mubr.bf16.gmra.mrb[0].mxu0 %v1074
    %v1245 = vpop.f32.mrb[0].mxu0
    %v1246 = vadd.f32 %v1113, %v1245
    %v1247 = vpop.f32.mrb[0].mxu0
    %v1248 = vpop.f32.mrb[0].mxu0
    %v1249 = vadd.f32 %v1113, %v1248
    %v1250 = vpop.f32.mrb[0].mxu0
    %1251 = vdwg.mxu0
    %v1252 = vpack.c.bf16 %v1249, %v1246
    %vm1253 = vcmp.gt.bf16.partialorder %v1252, 0
    %v1254 = vmul.bf16 %v1252, 1045249613
    %v1255 = vsel %vm1253, %v1252, %v1254
    %v1256 = vld [vmem:[%s7] sm:$0xf]
    %v1257 = vld [vmem:[%s7 + $0x4] sm:$0xf]
    %v1258 = vld [vmem:[%s7 + $0x8] sm:$0xf]
    %v1259 = vld [vmem:[%s7 + $0xc] sm:$0xf]
    %v1260 = vld [vmem:[%s7 + $0x10] sm:$0xf]
    %v1261 = vld [vmem:[%s7 + $0x14] sm:$0xf]
    %v1262 = vld [vmem:[%s7 + $0x18] sm:$0xf]
    %v1263 = vld [vmem:[%s7 + $0x1c] sm:$0xf]
    %v1264 = vld [vmem:[%s7 + $0x20] sm:$0xf]
    %v1265 = vld [vmem:[%s7 + $0x24] sm:$0xf]
    %v1266 = vld [vmem:[%s7 + $0x28] sm:$0xf]
    %v1267 = vld [vmem:[%s7 + $0x2c] sm:$0xf]
    %v1268 = vld [vmem:[%s7 + $0x30] sm:$0xf]
    %v1269 = vld [vmem:[%s7 + $0x34] sm:$0xf]
    %v1270 = vld [vmem:[%s7 + $0x38] sm:$0xf]
    %v1271 = vld [vmem:[%s7 + $0x3c] sm:$0xf]
    %v1272 = vld [vmem:[%s8] sm:$0x1]
    %v1274 = vlaneseq
    %v1275 = vshrl.u32 %v1274, 7
    %v1276 = vsub.s32 0, %v1275
    %v1277 = vrot.slane %v1272, %v1276
    %v1295 = vunpack.c.l.b16 %v1256
    %v1296 = vunpack.c.l.b16 %v1257
    %v1297 = vunpack.c.l.b16 %v1258
    %v1298 = vunpack.c.l.b16 %v1259
    %v1299 = vunpack.c.l.b16 %v1260
    %v1300 = vunpack.c.l.b16 %v1261
    %v1301 = vunpack.c.l.b16 %v1262
    %v1302 = vunpack.c.l.b16 %v1263
    %v1303 = vunpack.c.l.b16 %v1264
    %v1304 = vunpack.c.l.b16 %v1265
    %v1305 = vunpack.c.l.b16 %v1266
    %v1306 = vunpack.c.l.b16 %v1267
    %v1307 = vunpack.c.l.b16 %v1268
    %v1308 = vunpack.c.l.b16 %v1269
    %v1309 = vunpack.c.l.b16 %v1270
    %v1310 = vunpack.c.l.b16 %v1271
    %v1311 = vpack.c.b16 %v1296, %v1295
    %v1312 = vpack.c.b16 %v1298, %v1297
    %v1313 = vpack.c.b16 %v1300, %v1299
    %v1314 = vpack.c.b16 %v1302, %v1301
    %v1315 = vpack.c.b16 %v1304, %v1303
    %v1316 = vpack.c.b16 %v1306, %v1305
    %v1317 = vpack.c.b16 %v1308, %v1307
    %v1318 = vpack.c.b16 %v1310, %v1309
    %1327 = vmatprep.subr.bf16.mxu0 0
    %1328 = vmatpush1.bf16.msra.mxu0 %v1311
    %1329 = vmatprep.subr.bf16.mxu0 0
    %1330 = vmatpush1.bf16.msra.mxu0 %v1312
    %1331 = vmatprep.subr.bf16.mxu0 0
    %1332 = vmatpush1.bf16.msra.mxu0 %v1313
    %1333 = vmatprep.subr.bf16.mxu0 0
    %1334 = vmatpush1.bf16.msra.mxu0 %v1314
    %1335 = vmatprep.subr.bf16.mxu0 0
    %1336 = vmatpush1.bf16.msra.mxu0 %v1315
    %1337 = vmatprep.subr.bf16.mxu0 0
    %1338 = vmatpush1.bf16.msra.mxu0 %v1316
    %1339 = vmatprep.subr.bf16.mxu0 0
    %1340 = vmatpush1.bf16.msra.mxu0 %v1317
    %1341 = vmatprep.subr.bf16.mxu0 0
    %1342 = vmatpush1.bf16.msra.mxu0 %v1318
    %1343 = vmatprep.subr.bf16.mxu0 0
    %1344 = vmatpush1.bf16.msra.mxu0 0
    %1345 = vmatprep.subr.bf16.mxu0 0
    %1346 = vmatpush1.bf16.msra.mxu0 0
    %1347 = vmatprep.subr.bf16.mxu0 0
    %1348 = vmatpush1.bf16.msra.mxu0 0
    %1349 = vmatprep.subr.bf16.mxu0 0
    %1350 = vmatpush1.bf16.msra.mxu0 0
    %1351 = vmatprep.subr.bf16.mxu0 0
    %1352 = vmatpush1.bf16.msra.mxu0 0
    %1353 = vmatprep.subr.bf16.mxu0 0
    %1354 = vmatpush1.bf16.msra.mxu0 0
    %1355 = vmatprep.subr.bf16.mxu0 0
    %1356 = vmatpush1.bf16.msra.mxu0 0
    %1357 = vmatprep.subr.bf16.mxu0 0
    %1358 = vmatpush1.bf16.msra.mxu0 0
    %1359 = vmatprep.mubr.bf16.mxu0 0
    %1360 = vmatmul.mubr.bf16.gmra.mrb[0].mxu0 %v1255
    %v1361 = vpop.f32.mrb[0].mxu0
    %v1362 = vadd.f32 %v1277, %v1361
    %v1363 = vpop.f32.mrb[0].mxu0
    %v1364 = vpop.f32.mrb[0].mxu0
    %v1365 = vadd.f32 %v1277, %v1364
    %v1366 = vpop.f32.mrb[0].mxu0
    %1367 = vdwg.mxu0
    %v1368 = vpack.c.bf16 %v1365, %v1362
    %v1370 = vunpack.c.l.b16 %v1368
    %v1371 = vunpack.c.h.b16 %v1368
    %v1372 = vpack.c.b16 %v1370, %v1370
    %v1373 = vpack.c.b16 %v1371, %v1371
    %1376 = vst [vmem:[%s9] sm:$0xf] %v1372
    %1377 = vst [vmem:[%s9 + $0x4] sm:$0xf] %v1373
    // Predicated region
    $region50: #{discriminator_forward.1} parent=1 // pred_check
      _
    $region51: #{discriminator_forward.1} parent=1 // pred_check_branch
      %1379 = sbr.rel (0) target = $region53
    $region52: #{discriminator_forward.1} parent=1 // pred_region
      _
    $region53: #{discriminator_forward.1} parent=1 // pred_fallthru
      _
    // Predicated region
    $region54: #{discriminator_forward.1} parent=1 // pred_check
      _
    $region55: #{discriminator_forward.1} parent=1 // pred_check_branch
      %1381 = sbr.rel (0) target = $region57
    $region56: #{discriminator_forward.1} parent=1 // pred_region
      _
    $region57: #{discriminator_forward.1} parent=1 // pred_fallthru
      _
    %1382 = vsyncpa [#allocation3], 1
    %1383 = vsyncpa [#allocation5], 1

</llo_original>
